<compile_context>
chip_gen: v7x
topology: tpu7x:2x2x1
jax: 0.10.0
libtpu: 0.0.40
codegen_flags: <defaults>
</compile_context>

<pallas_src>
import jax
import jax.numpy as jnp
from jax.experimental import pallas as pl
from jax.experimental.pallas import tpu as pltpu

LANES = 128
TARGET_TILE_BYTES = 4 << 20   # ~4 MiB input tile; x2 (in+out) x2 (double buffer)
VMEM_LIMIT_BYTES = 32 << 20   # covers the ~16-17 MiB of live buffers on all chips


def _round_up(v, m):
    return ((v + m - 1) // m) * m


def _scale_kernel(factor_ref, x_ref, o_ref):
    # factor arrives via SMEM scalar prefetch (f32). Multiply in f32 and cast
    # once -- the op is HBM-bound, so the extra VPU cast is free.
    f = factor_ref[0]
    o_ref[...] = (x_ref[...].astype(jnp.float32) * f).astype(o_ref.dtype)


def _scale_slab(x2d, factor_arr):
    """factor * x2d for a lane-dense (rows, 128) slab."""
    rows, lanes = x2d.shape
    itemsize = jnp.dtype(x2d.dtype).itemsize
    # Native sublane packing: 8 rows for f32, 16 for bf16, 32 for int8/fp8.
    sub = max(8, 32 // itemsize)

    # ~TARGET_TILE_BYTES tiles, balanced across grid steps so the tail block
    # is not tiny (helps v7x two-TC balance); the cdiv grid masks any ragged
    # final block.
    target_rows = max(sub, TARGET_TILE_BYTES // (lanes * itemsize))
    num_blocks = pl.cdiv(rows, target_rows)
    tm = min(rows, _round_up(pl.cdiv(rows, num_blocks), sub))
    grid = (pl.cdiv(rows, tm),)

    n = rows * lanes
    cost = pl.CostEstimate(flops=n, transcendentals=0,
                           bytes_accessed=2 * n * itemsize)

    return pl.pallas_call(
        _scale_kernel,
        out_shape=jax.ShapeDtypeStruct((rows, lanes), x2d.dtype),
        grid_spec=pltpu.PrefetchScalarGridSpec(
            num_scalar_prefetch=1,
            grid=grid,
            in_specs=[pl.BlockSpec((tm, lanes), lambda i, f: (i, 0))],
            out_specs=pl.BlockSpec((tm, lanes), lambda i, f: (i, 0)),
        ),
        compiler_params=pltpu.CompilerParams(
            dimension_semantics=("parallel",),
            vmem_limit_bytes=VMEM_LIMIT_BYTES,
        ),
        cost_estimate=cost,
    )(factor_arr, x2d)


def scale_norm(x, factor):
    """factor * x (scaleNorm.forward) with the bulk of the work in Pallas.

    x: any-shape float array (e.g. NCHW conv feature map).
    factor: python scalar (non-learnable) or 0-d/1-element array (learnable).
    """
    orig_shape = x.shape
    dtype = x.dtype
    n = x.size
    factor_arr = jnp.asarray(factor, dtype=jnp.float32).reshape((1,))

    if n == 0:
        return x

    x_flat = x.reshape(-1)                 # bitcast, no data movement
    n_main = (n // LANES) * LANES

    if n_main == n:
        # Common case: fully lane-dense, zero wrapper-side copies.
        out2d = _scale_slab(x_flat.reshape(n // LANES, LANES), factor_arr)
        return out2d.reshape(orig_shape)

    if n_main == 0:
        # Fewer than 128 elements: a kernel launch is not worth it.
        return (x_flat.astype(jnp.float32) * factor_arr[0]).astype(dtype).reshape(orig_shape)

    # Ragged size: kernel over the first rows*128 elements, XLA handles the
    # <=127-element remainder (review option (b); no full-array pad/slice).
    main = _scale_slab(
        x_flat[:n_main].reshape(n_main // LANES, LANES), factor_arr
    ).reshape(-1)
    tail = (x_flat[n_main:].astype(jnp.float32) * factor_arr[0]).astype(dtype)
    return jnp.concatenate([main, tail]).reshape(orig_shape)


if __name__ == "__main__":
    key = jax.random.PRNGKey(0)

    # NCHW input, like a PyTorch conv feature map (size % 128 == 0 path).
    x = jax.random.normal(key, (2, 4, 16, 16), dtype=jnp.float32)

    # Non-learnable path: python float factor.
    factor = 0.5
    out = jax.block_until_ready(scale_norm(x, factor))
    assert out.shape == x.shape and out.dtype == x.dtype
    assert jnp.allclose(out, factor * x, atol=1e-6, rtol=1e-6)

    # Learnable path: factor as a jax array (nn.Parameter analogue).
    factor_p = jnp.asarray(1.7, dtype=jnp.float32)
    out_p = jax.block_until_ready(scale_norm(x, factor_p))
    assert jnp.allclose(out_p, factor_p * x, atol=1e-6, rtol=1e-6)

    # bfloat16 path: multiply happens in f32, single round to bf16.
    x_bf = x.astype(jnp.bfloat16)
    out_bf = jax.block_until_ready(scale_norm(x_bf, factor_p))
    ref_bf = (x_bf.astype(jnp.float32) * factor_p).astype(jnp.bfloat16)
    assert out_bf.dtype == jnp.bfloat16
    assert jnp.allclose(out_bf.astype(jnp.float32), ref_bf.astype(jnp.float32),
                        atol=1e-2, rtol=1e-2)

    # Ragged-size path (size % 128 != 0): kernel prefix + XLA tail.
    x_ragged = jax.random.normal(key, (2, 3, 11, 13), dtype=jnp.float32)
    out_r = jax.block_until_ready(scale_norm(x_ragged, 0.25))
    assert out_r.shape == x_ragged.shape
    assert jnp.allclose(out_r, 0.25 * x_ragged, atol=1e-6, rtol=1e-6)

    print("KERNEL_OK")
</pallas_src>

<mosaic_0001>
module attributes {stable_mosaic.version = 11 : i64} {
  func.func @_scale_kernel(%arg0: i32, %arg1: memref<1xf32, #tpu.memory_space<smem>>, %arg2: memref<16x128xf32, #tpu.memory_space<vmem>>, %arg3: memref<16x128xf32, #tpu.memory_space<vmem>>) attributes {dimension_semantics = [#tpu.dimension_semantics<parallel>], iteration_bounds = array<i64: 1>, scalar_prefetch = 1 : i64, scratch_operands = 0 : i64, tpu.core_type = #tpu.core_type<tc>, window_params = [{transform_indices = @transform_0, window_bounds = array<i64: 16, 128>}, {transform_indices = @transform_1, window_bounds = array<i64: 16, 128>}]} {
    %c0 = arith.constant 0 : index
    %0 = memref.load %arg1[%c0] : memref<1xf32, #tpu.memory_space<smem>>
    %c0_0 = arith.constant 0 : index
    %c0_1 = arith.constant 0 : index
    %1 = vector.load %arg2[%c0_0, %c0_1] : memref<16x128xf32, #tpu.memory_space<vmem>>, vector<16x128xf32>
    %2 = vector.broadcast %0 : f32 to vector<16x128xf32>
    %3 = arith.mulf %1, %2 : vector<16x128xf32>
    %c0_2 = arith.constant 0 : index
    %c0_3 = arith.constant 0 : index
    %4 = vector.load %arg3[%c0_2, %c0_3] : memref<16x128xf32, #tpu.memory_space<vmem>>, vector<16x128xf32>
    tpu.vector_store %arg3[%c0_2, %c0_3], %3 {strides = array<i32>} : memref<16x128xf32, #tpu.memory_space<vmem>>, vector<16x128xf32>,
    return
  }
  func.func @transform_0(%arg0: i32, %arg1: memref<1xf32, #tpu.memory_space<smem>>) -> (i32, i32) {
    %c0_i32 = arith.constant 0 : i32
    %c0_i32_0 = arith.constant 0 : i32
    return %arg0, %c0_i32 : i32, i32
  }
  func.func @transform_1(%arg0: i32, %arg1: memref<1xf32, #tpu.memory_space<smem>>) -> (i32, i32) {
    %c0_i32 = arith.constant 0 : i32
    %c0_i32_0 = arith.constant 0 : i32
    return %arg0, %c0_i32 : i32, i32
  }
}

</mosaic_0001>

<llo_original>
// kernel: tpu_custom_call.1
$region0: #{tpu_custom_call.1}
  #allocation0 [shape = 'u32[]', space=smem, size = 0x4, offset = 0x4, fixed_abs, tag = 'smem constant byte address 0x4 - core index']
  #allocation1 [shape = 'u32[144,128]{1,0:T(1,128)}', space=vmem, size = 0x12000, scoped, tag = 'internal scratch']
  #allocation2 [shape = 's32[1]{0}', space=sflag, size = 0x4, scoped, tag = 'scoped memory for tpu_custom_call.1']
  #allocation3 [shape = 'f32[1]{0:T(128)S(6)}', space=smem, size = 0x200, scoped, tag = 'prefetched SMEM operand 0']
  %s0 = inlined_call_operand.<no memory space> [shape: f32[1], index: 0, kind: input, shape index: {}]
  %s1 = inlined_call_operand.hbm [shape: f32[16,128], index: 1, kind: input, shape index: {}]
  %s2 = inlined_call_operand.hbm [shape: f32[16,128], index: 2, kind: output, shape index: {}]
  %s3 = sld [smem:[#allocation0]]
  $region18: #{tpu_custom_call.1} parent=0
    _
  %s5 = ssub.s32 1, %s3
  %s6 = scalar_select 0, %s5, %s3
  %7 = sst [smem:[#allocation3]] %s0
  $region1: #{tpu_custom_call.1} parent=0
    #allocation4 [shape = 'u8[8192]{0}', space=vmem, size = 0x2000, scoped, tag = 'input window, operand 1, single buffered']
    #allocation5 [shape = 's32[1]{0}', space=sflag, size = 0x4, scoped, tag = 'scoped memory for tpu_custom_call.1']
    #allocation6 [shape = 's32[1]{0}', space=sflag, size = 0x4, scoped, tag = 'scoped memory for tpu_custom_call.1']
    #allocation7 [shape = 'u8[8192]{0}', space=vmem, size = 0x2000, scoped, tag = 'output window, operand 0, single buffered']
    %8 = vsyncpa [#allocation5], 0
    %9 = vsyncpa [#allocation6], 0
    // Predicated region
    $region2: #{tpu_custom_call.1} parent=1 // pred_check
      _
    $region3: #{tpu_custom_call.1} parent=1 // pred_check_branch
      %11 = sbr.rel (0) target = $region5
    $region4: #{tpu_custom_call.1} parent=1 // pred_region
      %s13 = ssub.s32 256, 256
      %14 = vsyncadd [#allocation5], %s13
      %s15 = sshll.u32 [#allocation4], 4
      %s16 = int_to_ptr.vmem [resolvable:$true] %s15
      %21 = dma.hbm_to_vmem [thread:$0]  %s1, 256, %s16, [#allocation5], 128, 128, 8
    $region5: #{tpu_custom_call.1} parent=1 // pred_fallthru
      _
    // Predicated region
    $region6: #{tpu_custom_call.1} parent=1 // pred_check
      _
    $region7: #{tpu_custom_call.1} parent=1 // pred_check_branch
      %23 = sbr.rel (0) target = $region9
    $region8: #{tpu_custom_call.1} parent=1 // pred_region
      %24 = dma.done [#allocation5], 256
    $region9: #{tpu_custom_call.1} parent=1 // pred_fallthru
      _
    %s25 = sld [smem:[#allocation3]]
    %v26 = vld [vmem:[#allocation4] sm:$0xff]
    %v27 = vld [vmem:[#allocation4 + $0x8] sm:$0xff]
    %v28 = vstv %s25
    %v29 = vmul.f32 %v26, %v28
    %v30 = vmul.f32 %v27, %v28
    %31 = vst [vmem:[#allocation7] sm:$0xff] %v29
    %32 = vst [vmem:[#allocation7 + $0x8] sm:$0xff] %v30
    // Predicated region
    $region10: #{tpu_custom_call.1} parent=1 // pred_check
      _
    $region11: #{tpu_custom_call.1} parent=1 // pred_check_branch
      %34 = sbr.rel (0) target = $region13
    $region12: #{tpu_custom_call.1} parent=1 // pred_region
      %s36 = ssub.s32 256, 256
      %37 = vsyncadd [#allocation6], %s36
      %s38 = sshll.u32 [#allocation7], 4
      %s39 = int_to_ptr.vmem [resolvable:$true] %s38
      %44 = dma.vmem_to_hbm [thread:$0]  %s39, 256, %s2, [#allocation6], 128, 128, 8
    $region13: #{tpu_custom_call.1} parent=1 // pred_fallthru
      _
    // Predicated region
    $region14: #{tpu_custom_call.1} parent=1 // pred_check
      _
    $region15: #{tpu_custom_call.1} parent=1 // pred_check_branch
      %46 = sbr.rel (0) target = $region17
    $region16: #{tpu_custom_call.1} parent=1 // pred_region
      %47 = dma.done [#allocation6], 256
    $region17: #{tpu_custom_call.1} parent=1 // pred_fallthru
      _
    %48 = vsyncpa [#allocation5], 1
    %49 = vsyncpa [#allocation6], 1

</llo_original>
